<compile_context>
chip_gen: v6e
topology: v6e:2x2x1
jax: 0.10.0
libtpu: 0.0.40
codegen_flags: <defaults>
</compile_context>

<pallas_src>
import numpy as np
import jax
import jax.numpy as jnp
from jax.experimental import pallas as pl
from jax.experimental.pallas import tpu as pltpu


def _round_up(x, m):
    return ((x + m - 1) // m) * m


# ----------------------------- Pallas kernel --------------------------------
def _linear_kernel(x_ref, w_ref, b_ref, o_ref):
    # x_ref: (tm, F) f32 tile  -> cast to bf16 here (fused, no extra HBM pass)
    # w_ref: (F, tn) bf16 slab, resident across the whole inner M sweep
    # b_ref: (1, tn) f32
    # o_ref: (tm, tn) f32
    x_bf = x_ref[...].astype(jnp.bfloat16)
    acc = jnp.dot(x_bf, w_ref[...], preferred_element_type=jnp.float32)
    o_ref[...] = (acc + b_ref[...]).astype(o_ref.dtype)


# ------------------------------ Tiling plan ----------------------------------
def _vmem_plan():
    """Per-generation VMEM plan.

    Raise the scoped limit above the 16/32 MiB defaults (v5e/v6e have 128 MiB
    physical) but stay well inside v7x's 64 MiB physical VMEM.  Falls back to
    the most conservative (v7x) numbers if the hardware query is unavailable.
    """
    try:
        phys = pltpu.get_tpu_info().vmem_capacity_bytes
    except Exception:
        phys = 64 * 1024 * 1024                      # assume smallest (v7x)
    limit = min(int(phys * 3 // 4), 96 * 1024 * 1024)  # 48 MiB v7x, 96 MiB v5e/v6e
    budget = int(limit * 0.7)                          # headroom for compiler scratch
    return limit, budget


def _choose_tiles(M, F, C_pad, budget):
    """Pick (tm, tn).

    tn = C_pad when the (F, C_pad) bf16 weight slab fits, so W is fetched
    exactly once per call (the class axis is the outer grid axis).  tm is
    large to amortize the ~0.35us/step pipeline overhead but clamped so there
    are >= 2 M-tiles (both v7x TensorCores get work)."""
    tn = C_pad
    tm_cap = 1024 if budget >= 48 * 1024 * 1024 else 512
    tm = min(tm_cap, max(8, _round_up(pl.cdiv(M, 2), 8)))

    def vmem_bytes(tm_, tn_):
        return (2 * tm_ * F * 4          # x tiles, f32, double-buffered
                + 2 * F * tn_ * 2        # weight slab, bf16 (counted x2, conservative)
                + 2 * tm_ * tn_ * 4      # out tiles, f32, double-buffered
                + 2 * tn_ * 4            # bias
                + tm_ * F * 2            # in-kernel bf16 copy of the x tile
                + tm_ * tn_ * 4)         # matmul accumulator headroom

    # Shrink tm first (only adds grid steps), then the resident class slab
    # (costs one extra streaming pass over x per extra class tile), then tm.
    while vmem_bytes(tm, tn) > budget and tm > 128:
        tm = max(128, (tm // 2) // 8 * 8)
    while vmem_bytes(tm, tn) > budget and tn > 128:
        tn = max(128, (tn // 2) // 128 * 128)
    while vmem_bytes(tm, tn) > budget and tm > 8:
        tm = max(8, (tm // 2) // 8 * 8)
    # TODO(synk): if still over budget (F in the tens of thousands), add a K
    # (n_feats) grid axis with an f32 VMEM accumulator + pl.when init/finalize;
    # trigger it at roughly half the F threshold on v7x (64 MiB VMEM).
    return tm, tn


# ------------------------------ Host wrapper ----------------------------------
def linear_head_pallas(x_2d, w_bf, b_pad, n_class):
    """y = x_2d @ W + b on-TPU (single-pass GEMM projection head).

    x_2d : (M, F) float32      -- passed as-is: no host-side pad/copy/cast.
    w_bf : (F, C_pad) bfloat16 -- class dim zero-padded to a 128-multiple.
    b_pad: (1, C_pad) float32  -- zero-padded.
    Returns (M, n_class) float32.
    """
    M, F = x_2d.shape
    F_w, C_pad = w_bf.shape
    assert F_w == F

    vmem_limit, vmem_budget = _vmem_plan()
    tm, tn = _choose_tiles(M, F, C_pad, vmem_budget)

    ni = pl.cdiv(M, tm)        # partial trailing M tile -> masked stores
    nj = pl.cdiv(C_pad, tn)    # normally 1: whole class slab resident

    flops = 2 * M * F * C_pad
    bytes_accessed = (nj * M * F * 4     # x streamed once per class slab
                      + F * C_pad * 2    # weights fetched once
                      + C_pad * 4        # bias
                      + M * C_pad * 4)   # output

    # Grid order: class-slab axis OUTER so the (F, tn) weight block's index is
    # constant across the whole inner M sweep -> fetched once, stays resident,
    # while x/out tiles stream (BlockSpec double-buffers them automatically).
    y = pl.pallas_call(
        _linear_kernel,
        out_shape=jax.ShapeDtypeStruct((M, C_pad), jnp.float32),
        grid_spec=pltpu.PrefetchScalarGridSpec(
            num_scalar_prefetch=0,
            grid=(nj, ni),
            in_specs=[
                pl.BlockSpec((tm, F), lambda j, i: (i, 0)),   # x tile (f32)
                pl.BlockSpec((F, tn), lambda j, i: (0, j)),   # resident W (bf16)
                pl.BlockSpec((1, tn), lambda j, i: (0, j)),   # bias (f32)
            ],
            out_specs=pl.BlockSpec((tm, tn), lambda j, i: (i, j)),
        ),
        compiler_params=pltpu.CompilerParams(
            dimension_semantics=("parallel", "parallel"),
            vmem_limit_bytes=vmem_limit),
        cost_estimate=pl.CostEstimate(
            flops=flops, transcendentals=0, bytes_accessed=bytes_accessed),
    )(x_2d, w_bf, b_pad)

    return y[:, :n_class]


# ------------------------------ Model wrapper --------------------------------
class BaseModelPallas:
    """JAX/Pallas analogue of BaseModel(n_feats, n_class)."""

    def __init__(self, n_feats, n_class, key=None):
        self.n_feats = int(n_feats)
        self.n_class = int(n_class)
        if key is None:
            key = jax.random.PRNGKey(0)
        kw, kb = jax.random.split(key)

        # Deterministic synthetic parameter init (no checkpoint load).
        self.weight = (jax.random.normal(kw, (self.n_feats, self.n_class),
                                         dtype=jnp.float32)
                       / jnp.sqrt(jnp.float32(self.n_feats)))
        self.bias = jax.random.normal(kb, (1, self.n_class),
                                      dtype=jnp.float32) * 0.01

        # Pad ONLY the class dim to a 128-multiple (lane-dense output stores);
        # the feature (K) dim stays unpadded -- Mosaic zero-pads K in vregs.
        # Weight held in bf16 (halves W HBM traffic; f32 MXU accumulate in the
        # kernel), bias stays f32 for the f32 bias add.
        c_pad = _round_up(self.n_class, 128)
        self._w_padded = jnp.pad(
            self.weight, ((0, 0), (0, c_pad - self.n_class))
        ).astype(jnp.bfloat16)
        self._b_padded = jnp.pad(
            self.bias, ((0, 0), (0, c_pad - self.n_class))).astype(jnp.float32)

    def forward(self, x):
        # TODO(synk): BaseModel.forward is abstract in PyTorch; this is the
        # minimal concrete realization (per-frame linear projection head).
        B, T, F = x.shape
        assert F == self.n_feats
        x2d = x.reshape(B * T, F)          # view-like reshape, no copy
        y2d = linear_head_pallas(x2d, self._w_padded, self._b_padded,
                                 self.n_class)
        return y2d.reshape(B, T, self.n_class)

    def __call__(self, x):
        return self.forward(x)

    def transform_input_lengths(self, input_lengths):
        # This model does not change the time resolution.
        return input_lengths

    def num_trainable_parameters(self):
        return int(np.prod(self.weight.shape) + np.prod(self.bias.shape))

    def __str__(self):
        return ("BaseModelPallas(n_feats={}, n_class={})\n"
                "Trainable parameters: {}").format(
                    self.n_feats, self.n_class,
                    self.num_trainable_parameters())


# ---------------------------------- Main --------------------------------------
if __name__ == "__main__":
    key = jax.random.PRNGKey(0)
    k_in, k_model = jax.random.split(key)

    batch, time, n_feats, n_class = 2, 8, 32, 16
    x = jax.random.normal(k_in, (batch, time, n_feats), dtype=jnp.float32)

    model = BaseModelPallas(n_feats, n_class, key=k_model)

    y = model(x)
    y = jax.block_until_ready(y)

    # Cross-check against a host (numpy) reference at the same precision the
    # kernel uses: bf16-rounded x and W, f32 accumulate, f32 bias add.
    x_bf = np.asarray(x.astype(jnp.bfloat16).astype(jnp.float32)).reshape(-1, n_feats)
    w_bf = np.asarray(model.weight.astype(jnp.bfloat16).astype(jnp.float32))
    b_np = np.asarray(model.bias)
    y_ref = (x_bf @ w_bf + b_np).reshape(batch, time, n_class)
    np.testing.assert_allclose(np.asarray(y), y_ref, rtol=1e-4, atol=1e-4)

    assert y.shape == (batch, time, n_class)
    assert int(model.transform_input_lengths(jnp.array([time]))[0]) == time

    print("KERNEL_OK")
</pallas_src>

<mosaic_0001>
module attributes {stable_mosaic.version = 11 : i64} {
  func.func @_linear_kernel(%arg0: i32, %arg1: i32, %arg2: memref<8x32xf32, #tpu.memory_space<vmem>>, %arg3: memref<32x128xbf16, #tpu.memory_space<vmem>>, %arg4: memref<1x128xf32, #tpu.memory_space<vmem>>, %arg5: memref<8x128xf32, #tpu.memory_space<vmem>>) attributes {dimension_semantics = [#tpu.dimension_semantics<parallel>, #tpu.dimension_semantics<parallel>], iteration_bounds = array<i64: 1, 2>, scalar_prefetch = 0 : i64, scratch_operands = 0 : i64, tpu.core_type = #tpu.core_type<tc>, window_params = [{transform_indices = @transform_0, window_bounds = array<i64: 8, 32>}, {transform_indices = @transform_1, window_bounds = array<i64: 32, 128>}, {transform_indices = @transform_2, window_bounds = array<i64: 1, 128>}, {transform_indices = @transform_3, window_bounds = array<i64: 8, 128>}]} {
    %c0 = arith.constant 0 : index
    %c0_0 = arith.constant 0 : index
    %0 = vector.load %arg2[%c0, %c0_0] : memref<8x32xf32, #tpu.memory_space<vmem>>, vector<8x32xf32>
    %1 = arith.truncf %0 : vector<8x32xf32> to vector<8x32xbf16>
    %c0_1 = arith.constant 0 : index
    %c0_2 = arith.constant 0 : index
    %2 = vector.load %arg3[%c0_1, %c0_2] : memref<32x128xbf16, #tpu.memory_space<vmem>>, vector<32x128xbf16>
    %cst = arith.constant dense<0.000000e+00> : vector<8x128xf32>
    %3 = tpu.matmul %1, %2, %cst {dimension_numbers = #tpu.dot_dimension_numbers<[1], [0], [0], [1], [0, 0, 1, 1], [], []>} : vector<8x32xbf16>, vector<32x128xbf16>, vector<8x128xf32> -> vector<8x128xf32>
    %c0_3 = arith.constant 0 : index
    %c0_4 = arith.constant 0 : index
    %4 = vector.load %arg4[%c0_3, %c0_4] : memref<1x128xf32, #tpu.memory_space<vmem>>, vector<1x128xf32>
    %5 = vector.broadcast %4 : vector<1x128xf32> to vector<8x128xf32>
    %6 = arith.addf %3, %5 : vector<8x128xf32>
    %c0_5 = arith.constant 0 : index
    %c0_6 = arith.constant 0 : index
    %7 = vector.load %arg5[%c0_5, %c0_6] : memref<8x128xf32, #tpu.memory_space<vmem>>, vector<8x128xf32>
    tpu.vector_store %arg5[%c0_5, %c0_6], %6 {strides = array<i32>} : memref<8x128xf32, #tpu.memory_space<vmem>>, vector<8x128xf32>,
    return
  }
  func.func @transform_0(%arg0: i32, %arg1: i32) -> (i32, i32) {
    %c0_i32 = arith.constant 0 : i32
    %c0_i32_0 = arith.constant 0 : i32
    return %arg1, %c0_i32 : i32, i32
  }
  func.func @transform_1(%arg0: i32, %arg1: i32) -> (i32, i32) {
    %c0_i32 = arith.constant 0 : i32
    %c0_i32_0 = arith.constant 0 : i32
    return %c0_i32, %arg0 : i32, i32
  }
  func.func @transform_2(%arg0: i32, %arg1: i32) -> (i32, i32) {
    %c0_i32 = arith.constant 0 : i32
    %c0_i32_0 = arith.constant 0 : i32
    return %c0_i32, %arg0 : i32, i32
  }
  func.func @transform_3(%arg0: i32, %arg1: i32) -> (i32, i32) {
    %c0_i32 = arith.constant 0 : i32
    return %arg1, %arg0 : i32, i32
  }
}

</mosaic_0001>

<llo_original>
// kernel: tpu_custom_call.1
$region0: #{tpu_custom_call.1}
  #allocation0 [shape = 'u32[]', space=smem, size = 0x4, offset = 0x4, fixed_abs, tag = 'smem constant byte address 0x4 - core index']
  #allocation1 [shape = 'u32[144,128]{1,0:T(1,128)}', space=vmem, size = 0x12000, scoped, tag = 'internal scratch']
  %s0 = inlined_call_operand.hbm [shape: f32[16,32], index: 0, kind: input, shape index: {}]
  %s1 = inlined_call_operand.hbm [shape: bf16[32,128], index: 1, kind: input, shape index: {}]
  %s2 = inlined_call_operand.vmem [shape: f32[1,128], index: 2, kind: input, shape index: {}]
  %s3 = inlined_call_operand.hbm [shape: f32[16,128], index: 3, kind: output, shape index: {}]
  %s4 = sld [smem:[#allocation0]]
  $region53: #{tpu_custom_call.1} parent=0
    _
  %s6 = ssub.s32 1, %s4
  %s7 = scalar_select 0, %s6, %s4
  $region1: #{tpu_custom_call.1} parent=0
    #allocation2 [shape = 'u8[8192]{0}', space=vmem, size = 0x2000, scoped, tag = 'input window, operand 0']
    #allocation3 [shape = 's32[2]{0}', space=sflag, size = 0x8, scoped, tag = 'scoped memory for tpu_custom_call.1']
    #allocation4 [shape = 's32[2]{0}', space=sflag, size = 0x8, scoped, tag = 'scoped memory for tpu_custom_call.1']
    #allocation5 [shape = 'u8[8192]{0}', space=vmem, size = 0x2000, scoped, tag = 'input window, operand 1, single buffered']
    #allocation6 [shape = 's32[1]{0}', space=sflag, size = 0x4, scoped, tag = 'scoped memory for tpu_custom_call.1']
    #allocation7 [shape = 'u8[8192]{0}', space=vmem, size = 0x2000, scoped, tag = 'output window, operand 0']
    %8 = vsyncpa [#allocation3], 0
    %s9 = scalar_lea.sflag [#allocation3], 1
    %10 = vsyncpa %s9, 0
    %11 = vsyncpa [#allocation6], 0
    %12 = vsyncpa [#allocation4], 0
    %s13 = scalar_lea.sflag [#allocation4], 1
    %14 = vsyncpa %s13, 0
    loop: start=0, step=1, limit=4
    $region2: #{tpu_custom_call.1} parent=1 // loop_pre_header
      _
    $region3: #{tpu_custom_call.1} parent=1 // loop_header
      %s16 = sphi 0, %s20
      %p17 = scmp.ge.s32.totalorder %s16, 4
      %s23 = sphi 0, %s35
      %s24 = sphi 0, %s31
      %s25 = sphi 0, %s23
      %s26 = sphi 0, %s24
      %s27 = sphi 0, %s25
      %s28 = sphi 0, %s26
      %s38 = sphi 0, %s40
      %s41 = sphi 0, %s38
      %s42 = sphi 0, %s41
      %s58 = sphi 0, %s42
      %s64 = sphi 0, %s66
      %s67 = sphi 0, %s64
      %s68 = sphi 0, %s67
      %s84 = sphi 0, %s68
      %s90 = sphi 0, %s92
      %s93 = sphi 0, %s90
      %s94 = sphi 0, %s93
      %s110 = sphi 0, %s94
      %s118 = sphi 0, %s120
      %s121 = sphi 0, %s118
      %s122 = sphi 0, %s121
      %s138 = sphi 0, %s122
    $region4: #{tpu_custom_call.1} parent=1 // loop_header_branch
      %19 = sbr.rel (%p17) target = $region8
    $region5: #{tpu_custom_call.1} parent=1 // loop_body
      %s21 = ssub.s32 %s16, 1
      %s22 = ssub.s32 %s16, 2
      %s29 = sadd.s32 1, %s24
      %p30 = scmp.ge.s32.totalorder %s29, 2
      %s31 = scalar_select %p30, 0, %s29
      %s32 = sadd.s32 1, %s23
      %s33 = scalar_select %p30, %s32, %s23
      %p34 = scmp.ge.s32.totalorder %s33, 1
      %s35 = scalar_select %p34, 0, %s33
      %s36 = ssub.s32 %s24, %s31
      %p37 = scmp.eq.s32.totalorder %s36, 0
      %s39 = sadd.s32 %s38, 1
      %s40 = scalar_select %p37, %s38, %s39
      %p43 = pneg %p37
      %p44 = scmp.eq.s32.totalorder %s16, 1
      %p45 = por %p43, %p44
      %p46 = scmp.ne.s32.totalorder %s38, %s41
      %p47 = scmp.eq.s32.totalorder %s16, 0
      %p48 = por %p46, %p47
      %p49 = scmp.ne.s32.totalorder %s38, %s41
      %p50 = scmp.eq.s32.totalorder %s21, 1
      %p51 = por %p49, %p50
      %p52 = scmp.ne.s32.totalorder %s41, %s42
      %p53 = scmp.eq.s32.totalorder %s21, 0
      %p54 = por %p52, %p53
      %p55 = scmp.ne.s32.totalorder %s41, %s42
      %p56 = scmp.eq.s32.totalorder %s22, 1
      %p57 = por %p55, %p56
      %p59 = scmp.ne.s32.totalorder %s42, %s58
      %p60 = scmp.eq.s32.totalorder %s22, 0
      %p61 = por %p59, %p60
      %s62 = ssub.s32 %s23, %s35
      %p63 = scmp.eq.s32.totalorder %s62, 0
      %s65 = sadd.s32 %s64, 1
      %s66 = scalar_select %p63, %s64, %s65
      %p69 = pneg %p63
      %p70 = scmp.eq.s32.totalorder %s16, 1
      %p71 = por %p69, %p70
      %p72 = scmp.ne.s32.totalorder %s64, %s67
      %p73 = scmp.eq.s32.totalorder %s16, 0
      %p74 = por %p72, %p73
      %p75 = scmp.ne.s32.totalorder %s64, %s67
      %p76 = scmp.eq.s32.totalorder %s21, 1
      %p77 = por %p75, %p76
      %p78 = scmp.ne.s32.totalorder %s67, %s68
      %p79 = scmp.eq.s32.totalorder %s21, 0
      %p80 = por %p78, %p79
      %p81 = scmp.ne.s32.totalorder %s67, %s68
      %p82 = scmp.eq.s32.totalorder %s22, 1
      %p83 = por %p81, %p82
      %p85 = scmp.ne.s32.totalorder %s68, %s84
      %p86 = scmp.eq.s32.totalorder %s22, 0
      %p87 = por %p85, %p86
      %s88 = ssub.s32 %s23, %s35
      %p89 = scmp.eq.s32.totalorder %s88, 0
      %s91 = sadd.s32 %s90, 1
      %s92 = scalar_select %p89, %s90, %s91
      %p95 = pneg %p89
      %p96 = scmp.eq.s32.totalorder %s16, 1
      %p97 = por %p95, %p96
      %p98 = scmp.ne.s32.totalorder %s90, %s93
      %p99 = scmp.eq.s32.totalorder %s16, 0
      %p100 = por %p98, %p99
      %p101 = scmp.ne.s32.totalorder %s90, %s93
      %p102 = scmp.eq.s32.totalorder %s21, 1
      %p103 = por %p101, %p102
      %p104 = scmp.ne.s32.totalorder %s93, %s94
      %p105 = scmp.eq.s32.totalorder %s21, 0
      %p106 = por %p104, %p105
      %p107 = scmp.ne.s32.totalorder %s93, %s94
      %p108 = scmp.eq.s32.totalorder %s22, 1
      %p109 = por %p107, %p108
      %p111 = scmp.ne.s32.totalorder %s94, %s110
      %p112 = scmp.eq.s32.totalorder %s22, 0
      %p113 = por %p111, %p112
      %s114 = ssub.s32 %s24, %s31
      %s115 = ssub.s32 %s23, %s35
      %s116 = sor.u32 %s114, %s115
      %p117 = scmp.eq.s32.totalorder %s116, 0
      %s119 = sadd.s32 %s118, 1
      %s120 = scalar_select %p117, %s118, %s119
      %p123 = pneg %p117
      %p124 = scmp.eq.s32.totalorder %s16, 1
      %p125 = por %p123, %p124
      %p126 = scmp.ne.s32.totalorder %s118, %s121
      %p127 = scmp.eq.s32.totalorder %s16, 0
      %p128 = por %p126, %p127
      %p129 = scmp.ne.s32.totalorder %s118, %s121
      %p130 = scmp.eq.s32.totalorder %s21, 1
      %p131 = por %p129, %p130
      %p132 = scmp.ne.s32.totalorder %s121, %s122
      %p133 = scmp.eq.s32.totalorder %s21, 0
      %p134 = por %p132, %p133
      %p135 = scmp.ne.s32.totalorder %s121, %s122
      %p136 = scmp.eq.s32.totalorder %s22, 1
      %p137 = por %p135, %p136
      %p139 = scmp.ne.s32.totalorder %s122, %s138
      %p140 = scmp.eq.s32.totalorder %s22, 0
      %p141 = por %p139, %p140
      %p142 = scmp.le.s32.totalorder 1, %s16
      %p143 = scmp.lt.s32.totalorder %s16, 3
      %p144 = pnand %p142, %p143
      %p145 = pneg %p144
      // Predicated region
      $region9: #{tpu_custom_call.1} parent=5 // pred_check
        _
      $region10: #{tpu_custom_call.1} parent=5 // pred_check_branch
        %147 = sbr.rel (%p144) target = $region12
      $region11: #{tpu_custom_call.1} parent=5 // pred_region
        %s148 = ssub.s32 %s16, 1
        // Predicated region
        $region13: #{tpu_custom_call.1} parent=11 // pred_check
          %p149 = pneg %p80
        $region14: #{tpu_custom_call.1} parent=11 // pred_check_branch
          %151 = sbr.rel (%p149) target = $region16
        $region15: #{tpu_custom_call.1} parent=11 // pred_region
          %s153 = ssub.s32 256, 256
          %154 = vsyncadd [#allocation6], %s153
          %s155 = smul.addr %s25, 64
          %s156 = scalar_lea.hbm %s1, %s155
          %s157 = sshll.u32 [#allocation5], 4
          %s158 = int_to_ptr.vmem [resolvable:$true] %s157
          %163 = dma.hbm_to_vmem [thread:$0]  %s156, 256, %s158, [#allocation6], 64, 64, 4
        $region16: #{tpu_custom_call.1} parent=11 // pred_fallthru
          _
        // Predicated region
        $region17: #{tpu_custom_call.1} parent=11 // pred_check
          %p164 = pneg %p106
        $region18: #{tpu_custom_call.1} parent=11 // pred_check_branch
          %166 = sbr.rel (%p164) target = $region20
        $region19: #{tpu_custom_call.1} parent=11 // pred_region
          %p167 = scmp.lt.s32.totalorder %s25, 0
          %s168 = scalar_select %p167, %s25, 0
          %s169 = scalar_lea.vmem %s2, %s168
        $region20: #{tpu_custom_call.1} parent=11 // pred_fallthru
          _
      $region12: #{tpu_custom_call.1} parent=5 // pred_fallthru
        _
      %p170 = scmp.lt.s32.totalorder %s16, 2
      // Predicated region
      $region21: #{tpu_custom_call.1} parent=5 // pred_check
        %p171 = pneg %p170
      $region22: #{tpu_custom_call.1} parent=5 // pred_check_branch
        %173 = sbr.rel (%p171) target = $region24
      $region23: #{tpu_custom_call.1} parent=5 // pred_region
        // Predicated region
        $region25: #{tpu_custom_call.1} parent=23 // pred_check
          %p174 = pneg %p48
        $region26: #{tpu_custom_call.1} parent=23 // pred_check_branch
          %176 = sbr.rel (%p174) target = $region28
        $region27: #{tpu_custom_call.1} parent=23 // pred_region
          %s177 = sand.u32 %s38, 1
          %s178 = scalar_lea.sflag [#allocation3], %s177
          %s179 = sand.u32 %s38, 1
          %s180 = smul.addr %s179, 8
          %s181 = scalar_lea.vmem [#allocation2], %s180
          %s183 = ssub.s32 128, 128
          %184 = vsyncadd %s178, %s183
          %s185 = smul.addr %s24, 128
          %s186 = scalar_lea.hbm %s0, %s185
          %s188 = sshll.u32 %s181, 4
          %s189 = int_to_ptr.vmem [resolvable:$true] %s188
          %191 = dma.hbm_to_vmem [thread:$0]  %s186, 128, %s189, %s178
        $region28: #{tpu_custom_call.1} parent=23 // pred_fallthru
          _
      $region24: #{tpu_custom_call.1} parent=5 // pred_fallthru
        _
      %p192 = scmp.le.s32.totalorder 1, %s16
      %p193 = scmp.lt.s32.totalorder %s16, 3
      %p194 = pnand %p192, %p193
      %p195 = pneg %p194
      // Predicated region
      $region29: #{tpu_custom_call.1} parent=5 // pred_check
        _
      $region30: #{tpu_custom_call.1} parent=5 // pred_check_branch
        %197 = sbr.rel (%p194) target = $region32
      $region31: #{tpu_custom_call.1} parent=5 // pred_region
        %s198 = ssub.s32 %s16, 1
        %s199 = sand.u32 %s41, 1
        %s200 = scalar_lea.sflag [#allocation3], %s199
        %s201 = sand.u32 %s41, 1
        %s202 = smul.addr %s201, 8
        %s203 = scalar_lea.vmem [#allocation2], %s202
        // Predicated region
        $region33: #{tpu_custom_call.1} parent=31 // pred_check
          %p204 = pneg %p54
        $region34: #{tpu_custom_call.1} parent=31 // pred_check_branch
          %206 = sbr.rel (%p204) target = $region36
        $region35: #{tpu_custom_call.1} parent=31 // pred_region
          %207 = dma.done %s200, 128
        $region36: #{tpu_custom_call.1} parent=31 // pred_fallthru
          _
        // Predicated region
        $region37: #{tpu_custom_call.1} parent=31 // pred_check
          %p208 = pneg %p80
        $region38: #{tpu_custom_call.1} parent=31 // pred_check_branch
          %210 = sbr.rel (%p208) target = $region40
        $region39: #{tpu_custom_call.1} parent=31 // pred_region
          %211 = dma.done [#allocation6], 256
        $region40: #{tpu_custom_call.1} parent=31 // pred_fallthru
          _
        %s212 = sand.u32 %s41, 1
        %s213 = scalar_lea.sflag [#allocation3], %s212
        %s214 = sand.u32 %s41, 1
        %s215 = smul.addr %s214, 8
        %s216 = scalar_lea.vmem [#allocation2], %s215
        %p217 = pneg %p54
        %p218 = pneg %p51
        %p219 = pneg %p80
        %p220 = pneg %p77
        %p221 = scmp.lt.s32.totalorder %s25, 0
        %s222 = scalar_select %p221, %s25, 0
        %s223 = scalar_lea.vmem %s2, %s222
        %p224 = pneg %p106
        %p225 = pneg %p103
        %p226 = pneg %p134
        %p227 = pneg %p131
        %s228 = sand.u32 %s121, 1
        %s229 = scalar_lea.sflag [#allocation4], %s228
        %s230 = sand.u32 %s121, 1
        %s231 = smul.addr %s230, 8
        %s232 = scalar_lea.vmem [#allocation7], %s231
        %p233 = scmp.lt.s32.totalorder %s25, 0
        %s234 = scalar_select %p233, %s25, 0
        %s235 = scalar_lea.vmem %s2, %s234
        %v237 = vld [vmem:[%s203] sm:$0xff]
        %v238 = vpack.c.bf16 %v237, %v237
        %v239 = vld [vmem:[#allocation5] sm:$0xf]
        %v240 = vld [vmem:[#allocation5 + $0x4] sm:$0xf]
        %v241 = vld [vmem:[#allocation5 + $0x8] sm:$0xf]
        %v242 = vld [vmem:[#allocation5 + $0xc] sm:$0xf]
        %v243 = vld [vmem:[%s235] sm:$0x1]
        %v245 = vlaneseq
        %v246 = vshrl.u32 %v245, 7
        %v247 = vsub.s32 0, %v246
        %v248 = vrot.slane %v243, %v247
        %v254 = vunpack.c.l.b16 %v239
        %v255 = vunpack.c.l.b16 %v240
        %v256 = vunpack.c.l.b16 %v241
        %v257 = vunpack.c.l.b16 %v242
        %v258 = vpack.c.b16 %v255, %v254
        %v259 = vpack.c.b16 %v257, %v256
        %vm262 = vcmask 261120
        %v264 = vsel %vm262, %v238, 0
        %266 = vmatprep.subr.bf16.mxu0 0
        %267 = vmatpush1.bf16.msra.mxu0 0
        %268 = vmatprep.subr.bf16.mxu0 0
        %269 = vmatpush1.bf16.msra.mxu0 0
        %270 = vmatprep.subr.bf16.mxu0 0
        %271 = vmatpush1.bf16.msra.mxu0 0
        %272 = vmatprep.subr.bf16.mxu0 0
        %273 = vmatpush1.bf16.msra.mxu0 0
        %274 = vmatprep.subr.bf16.mxu0 0
        %275 = vmatpush1.bf16.msra.mxu0 0
        %276 = vmatprep.subr.bf16.mxu0 0
        %277 = vmatpush1.bf16.msra.mxu0 0
        %278 = vmatprep.subr.bf16.mxu0 0
        %279 = vmatpush1.bf16.msra.mxu0 %v259
        %280 = vmatprep.subr.bf16.mxu0 0
        %281 = vmatpush1.bf16.msra.mxu0 %v258
        %282 = vmatprep.subr.bf16.mxu0 0
        %283 = vmatpush2.bf16.msra.mxu0 0
        %284 = vmatprep.subr.bf16.mxu0 0
        %285 = vmatpush2.bf16.msra.mxu0 0
        %286 = vmatprep.subr.bf16.mxu0 0
        %287 = vmatpush2.bf16.msra.mxu0 0
        %288 = vmatprep.subr.bf16.mxu0 0
        %289 = vmatpush2.bf16.msra.mxu0 0
        %290 = vmatprep.subr.bf16.mxu0 0
        %291 = vmatpush2.bf16.msra.mxu0 0
        %292 = vmatprep.subr.bf16.mxu0 0
        %293 = vmatpush2.bf16.msra.mxu0 0
        %294 = vmatprep.subr.bf16.mxu0 0
        %295 = vmatpush2.bf16.msra.mxu0 0
        %296 = vmatprep.subr.bf16.mxu0 0
        %297 = vmatpush2.bf16.msra.mxu0 0
        %298 = vmatprep.mubr.bf16.mxu0 0
        %299 = vmatmul.mubr.bf16.gmra.mxu0 %v264
        %v300 = vpop.f32.mrf.mxu0
        %v301 = vadd.f32 %v248, %v300
        %v302 = vpop.f32.mrf.mxu0
        %v303 = vpop.f32.mrf.mxu0
        %v304 = vpop.f32.mrf.mxu0
        %305 = vdwg.mxu0
        %306 = vst [vmem:[%s232] sm:$0xff] %v301
        %s307 = sand.u32 %s121, 1
        %s308 = scalar_lea.sflag [#allocation4], %s307
        %s309 = sand.u32 %s121, 1
        %s310 = smul.addr %s309, 8
        %s311 = scalar_lea.vmem [#allocation7], %s310
        // Predicated region
        $region41: #{tpu_custom_call.1} parent=31 // pred_check
          %p312 = pneg %p131
        $region42: #{tpu_custom_call.1} parent=31 // pred_check_branch
          %314 = sbr.rel (%p312) target = $region44
        $region43: #{tpu_custom_call.1} parent=31 // pred_region
          %s316 = ssub.s32 128, 128
          %317 = vsyncadd %s308, %s316
          %s318 = sadd.s32 %s25, %s26
          %s319 = smul.addr %s318, 128
          %s320 = scalar_lea.hbm %s3, %s319
          %s322 = sshll.u32 %s311, 4
          %s323 = int_to_ptr.vmem [resolvable:$true] %s322
          %325 = dma.vmem_to_hbm [thread:$0]  %s323, 128, %s320, %s308
        $region44: #{tpu_custom_call.1} parent=31 // pred_fallthru
          _
      $region32: #{tpu_custom_call.1} parent=5 // pred_fallthru
        _
      %p326 = scmp.le.s32.totalorder 2, %s16
      // Predicated region
      $region45: #{tpu_custom_call.1} parent=5 // pred_check
        %p327 = pneg %p326
      $region46: #{tpu_custom_call.1} parent=5 // pred_check_branch
        %329 = sbr.rel (%p327) target = $region48
      $region47: #{tpu_custom_call.1} parent=5 // pred_region
        %s330 = ssub.s32 %s16, 2
        // Predicated region
        $region49: #{tpu_custom_call.1} parent=47 // pred_check
          %p331 = pneg %p137
        $region50: #{tpu_custom_call.1} parent=47 // pred_check_branch
          %333 = sbr.rel (%p331) target = $region52
        $region51: #{tpu_custom_call.1} parent=47 // pred_region
          %s334 = sand.u32 %s122, 1
          %s335 = scalar_lea.sflag [#allocation4], %s334
          %s336 = sand.u32 %s122, 1
          %s337 = smul.addr %s336, 8
          %s338 = scalar_lea.vmem [#allocation7], %s337
          %339 = dma.done %s335, 128
        $region52: #{tpu_custom_call.1} parent=47 // pred_fallthru
          _
      $region48: #{tpu_custom_call.1} parent=5 // pred_fallthru
        _
    $region6: #{tpu_custom_call.1} parent=1 // loop_footer
      %s20 = sadd.s32 1, %s16
    $region7: #{tpu_custom_call.1} parent=1 // loop_footer_branch
      %15 = sbr.rel target = $region3
    $region8: #{tpu_custom_call.1} parent=1 // loop_exit
      _
    %340 = vsyncpa [#allocation3], 1
    %s341 = scalar_lea.sflag [#allocation3], 1
    %342 = vsyncpa %s341, 1
    %343 = vsyncpa [#allocation6], 1
    %344 = vsyncpa [#allocation4], 1
    %s345 = scalar_lea.sflag [#allocation4], 1
    %346 = vsyncpa %s345, 1

</llo_original>
